<compile_context>
chip_gen: v7x
topology: tpu7x:2x2x1
jax: 0.10.0
libtpu: 0.0.40
codegen_flags: <defaults>
</compile_context>

<pallas_src>
import jax
import jax.numpy as jnp
from jax.experimental import pallas as pl
from jax.experimental.pallas import tpu as pltpu


def branch_kernel(x_ref, w1_ref, b1_ref, w2_ref, b2_ref, out_ref):
    # fc1: (tm, Din) @ (Din, H) + (1, H) — f32 accumulation on the MXU.
    h = jnp.dot(x_ref[...], w1_ref[...], preferred_element_type=jnp.float32)
    h = jnp.maximum(h + b1_ref[...], 0.0)          # bias broadcast + ReLU in f32
    # fc2: (tm, H) @ (H, Dout) + (1, Dout).  h stays f32 when W2 is f32
    # (astype is a no-op); in the optional bf16 mode it feeds the bf16 MXU
    # path.  Accumulation is always f32.
    o = jnp.dot(h.astype(w2_ref.dtype), w2_ref[...],
                preferred_element_type=jnp.float32)
    out_ref[...] = (o + b2_ref[...]).astype(out_ref.dtype)


def _cdiv(a, b):
    return -(-a // b)


def _round_up(x, m):
    return _cdiv(x, m) * m


def _vmem_capacity_bytes():
    try:
        return int(pltpu.get_tpu_info().vmem_capacity_bytes)
    except Exception:
        return 64 * 1024 * 1024          # conservative default: v7x per-TC VMEM


def branch_forward(x, w1, b1, w2, b2, *, tm=None, use_bf16=False):
    """x: (B, Din); w1: (Din, H); b1: (H,); w2: (H, Dout); b2: (Dout,).

    Wrap calls in jax.jit so the residual pad/reshape/slice around the
    pallas_call fuse and per-op dispatch overhead disappears.
    """
    B, Din = x.shape
    H = w1.shape[1]
    Dout = w2.shape[1]
    out_dtype = x.dtype
    SUB = 8                                   # f32 sublane granularity

    if use_bf16:
        # Optional reduced-precision mode: halves HBM bytes for x / weights
        # (this kernel is memory bound).  Biases and accumulation stay f32.
        x = x.astype(jnp.bfloat16)
        w1 = w1.astype(jnp.bfloat16)
        w2 = w2.astype(jnp.bfloat16)

    x_sz = jnp.dtype(x.dtype).itemsize
    w_sz = jnp.dtype(w1.dtype).itemsize
    o_sz = jnp.dtype(out_dtype).itemsize

    # Per-generation VMEM budget (v5e/v6e ~128 MiB, v7x 64 MiB per TC).
    vmem_cap = _vmem_capacity_bytes()
    budget = int(0.75 * vmem_cap)

    # Resident weights/biases; the pipeliner double-buffers them by default,
    # so count them twice.
    resident_bytes = 2 * (w1.size * w_sz + w2.size * w_sz + 4 * (H + Dout))
    # TODO(synk): if resident_bytes ever exceeds `budget` (large real models),
    # fall back to tiling fc2 over H (reduction grid axis marked "arbitrary"
    # with a pl.when-initialized accumulator) instead of resident weights.

    # Bytes that scale with the batch-tile height: double-buffered x/out rows
    # plus the f32 intermediates (h, o).
    per_row_bytes = 2 * Din * x_sz + 2 * Dout * o_sz + 4 * (H + Dout)
    tm_cap = max(SUB,
                 ((budget - resident_bytes) // max(per_row_bytes, 1)) // SUB * SUB)

    if tm is None:
        # >=2 grid steps whenever the batch allows it (v7x megacore shard);
        # otherwise one big tile (v5e/v6e single-TC: amortize ~0.35us/step).
        # tm ~ ceil(B / n_steps) keeps the last tile mostly real rows.
        n_min = 2 if B >= 2 * SUB else 1
        n_steps = max(n_min, _cdiv(B, tm_cap))
        tm = min(_round_up(_cdiv(B, n_steps), SUB), tm_cap)
    else:
        tm = max(SUB, _round_up(tm, SUB))
    n_steps = _cdiv(B, tm)
    B_p = n_steps * tm

    # Only x is (row-)padded, and only when B isn't a tile multiple.
    xp = x if B_p == B else jnp.zeros((B_p, Din), x.dtype).at[:B].set(x)
    b1r = b1.reshape(1, H).astype(jnp.float32)
    b2r = b2.reshape(1, Dout).astype(jnp.float32)

    bytes_needed = resident_bytes + tm * per_row_bytes
    vmem_limit = int(min(max(2 * bytes_needed, 32 * 1024 * 1024), budget))

    out_p = pl.pallas_call(
        branch_kernel,
        out_shape=jax.ShapeDtypeStruct((B_p, Dout), out_dtype),
        grid_spec=pltpu.PrefetchScalarGridSpec(
            num_scalar_prefetch=0,
            grid=(n_steps,),
            in_specs=[
                pl.BlockSpec((tm, Din), lambda i: (i, 0)),    # x: batch-tiled
                pl.BlockSpec((Din, H), lambda i: (0, 0)),     # W1: VMEM-resident
                pl.BlockSpec((1, H), lambda i: (0, 0)),       # b1: resident
                pl.BlockSpec((H, Dout), lambda i: (0, 0)),    # W2: resident
                pl.BlockSpec((1, Dout), lambda i: (0, 0)),    # b2: resident
            ],
            out_specs=pl.BlockSpec((tm, Dout), lambda i: (i, 0)),
        ),
        compiler_params=pltpu.CompilerParams(
            dimension_semantics=("parallel",),    # batch axis -> megacore shard
            vmem_limit_bytes=vmem_limit),
    )(xp, w1, b1r, w2, b2r)

    return out_p if B_p == B else out_p[:B]


def reference_forward(x, w1, b1, w2, b2):
    h = jnp.maximum(x @ w1 + b1, 0.0)
    return h @ w2 + b2


if __name__ == "__main__":
    # Module-consistent shapes: Branch(input_dim=32, hidden_dim=64,
    # output_dim=16); x is (batch, input_dim).
    batch, input_dim, hidden_dim, output_dim = 256, 32, 64, 16

    key = jax.random.PRNGKey(0)
    k_x, k_w1, k_b1, k_w2, k_b2 = jax.random.split(key, 5)

    x = jax.random.normal(k_x, (batch, input_dim), dtype=jnp.float32)

    # Deterministic parameter init (uniform, torch-Linear-like bounds).
    bound1 = 1.0 / (input_dim ** 0.5)
    w1 = jax.random.uniform(k_w1, (input_dim, hidden_dim),
                            minval=-bound1, maxval=bound1, dtype=jnp.float32)
    b1 = jax.random.uniform(k_b1, (hidden_dim,),
                            minval=-bound1, maxval=bound1, dtype=jnp.float32)

    bound2 = 1.0 / (hidden_dim ** 0.5)
    w2 = jax.random.uniform(k_w2, (hidden_dim, output_dim),
                            minval=-bound2, maxval=bound2, dtype=jnp.float32)
    b2 = jax.random.uniform(k_b2, (output_dim,),
                            minval=-bound2, maxval=bound2, dtype=jnp.float32)

    # jit the whole wrapper so pad/reshape/slice fuse around the pallas_call.
    fwd = jax.jit(branch_forward, static_argnames=("tm", "use_bf16"))

    # Explicit tile: grid=(2,) — exercises batch tiling + "parallel" sharding.
    out = fwd(x, w1, b1, w2, b2, tm=128)
    jax.block_until_ready(out)
    ref = reference_forward(x, w1, b1, w2, b2)
    assert out.shape == (batch, output_dim)
    assert jnp.allclose(out, ref, atol=1e-4, rtol=1e-4)

    # Auto tiling + ragged batch — exercises the row-pad / row-slice path.
    x2 = x[:200]
    out2 = fwd(x2, w1, b1, w2, b2)
    jax.block_until_ready(out2)
    ref2 = reference_forward(x2, w1, b1, w2, b2)
    assert out2.shape == (200, output_dim)
    assert jnp.allclose(out2, ref2, atol=1e-4, rtol=1e-4)

    print("KERNEL_OK")
</pallas_src>

<mosaic_0001>
module attributes {stable_mosaic.version = 11 : i64} {
  func.func @branch_kernel(%arg0: i32, %arg1: memref<128x32xf32, #tpu.memory_space<vmem>>, %arg2: memref<32x64xf32, #tpu.memory_space<vmem>>, %arg3: memref<1x64xf32, #tpu.memory_space<vmem>>, %arg4: memref<64x16xf32, #tpu.memory_space<vmem>>, %arg5: memref<1x16xf32, #tpu.memory_space<vmem>>, %arg6: memref<128x16xf32, #tpu.memory_space<vmem>>) attributes {dimension_semantics = [#tpu.dimension_semantics<parallel>], iteration_bounds = array<i64: 2>, scalar_prefetch = 0 : i64, scratch_operands = 0 : i64, tpu.core_type = #tpu.core_type<tc>, window_params = [{transform_indices = @transform_0, window_bounds = array<i64: 128, 32>}, {pipeline_mode = #tpu.pipeline_mode<synchronous>, transform_indices = @transform_1, window_bounds = array<i64: 32, 64>}, {pipeline_mode = #tpu.pipeline_mode<synchronous>, transform_indices = @transform_2, window_bounds = array<i64: 1, 64>}, {pipeline_mode = #tpu.pipeline_mode<synchronous>, transform_indices = @transform_3, window_bounds = array<i64: 64, 16>}, {pipeline_mode = #tpu.pipeline_mode<synchronous>, transform_indices = @transform_4, window_bounds = array<i64: 1, 16>}, {transform_indices = @transform_5, window_bounds = array<i64: 128, 16>}]} {
    %c0 = arith.constant 0 : index
    %c0_0 = arith.constant 0 : index
    %0 = vector.load %arg1[%c0, %c0_0] : memref<128x32xf32, #tpu.memory_space<vmem>>, vector<128x32xf32>
    %c0_1 = arith.constant 0 : index
    %c0_2 = arith.constant 0 : index
    %1 = vector.load %arg2[%c0_1, %c0_2] : memref<32x64xf32, #tpu.memory_space<vmem>>, vector<32x64xf32>
    %cst = arith.constant dense<0.000000e+00> : vector<128x64xf32>
    %2 = tpu.matmul %0, %1, %cst {dimension_numbers = #tpu.dot_dimension_numbers<[1], [0], [0], [1], [0, 0, 1, 1], [], []>} : vector<128x32xf32>, vector<32x64xf32>, vector<128x64xf32> -> vector<128x64xf32>
    %c0_3 = arith.constant 0 : index
    %c0_4 = arith.constant 0 : index
    %3 = vector.load %arg3[%c0_3, %c0_4] : memref<1x64xf32, #tpu.memory_space<vmem>>, vector<1x64xf32>
    %4 = vector.broadcast %3 : vector<1x64xf32> to vector<128x64xf32>
    %5 = arith.addf %2, %4 : vector<128x64xf32>
    %cst_5 = arith.constant 0.000000e+00 : f32
    %6 = vector.broadcast %cst_5 : f32 to vector<128x64xf32>
    %7 = arith.maximumf %5, %6 : vector<128x64xf32>
    %c0_6 = arith.constant 0 : index
    %c0_7 = arith.constant 0 : index
    %8 = vector.load %arg4[%c0_6, %c0_7] : memref<64x16xf32, #tpu.memory_space<vmem>>, vector<64x16xf32>
    %cst_8 = arith.constant dense<0.000000e+00> : vector<128x16xf32>
    %9 = tpu.matmul %7, %8, %cst_8 {dimension_numbers = #tpu.dot_dimension_numbers<[1], [0], [0], [1], [0, 0, 1, 1], [], []>} : vector<128x64xf32>, vector<64x16xf32>, vector<128x16xf32> -> vector<128x16xf32>
    %c0_9 = arith.constant 0 : index
    %c0_10 = arith.constant 0 : index
    %10 = vector.load %arg5[%c0_9, %c0_10] : memref<1x16xf32, #tpu.memory_space<vmem>>, vector<1x16xf32>
    %11 = vector.broadcast %10 : vector<1x16xf32> to vector<128x16xf32>
    %12 = arith.addf %9, %11 : vector<128x16xf32>
    %c0_11 = arith.constant 0 : index
    %c0_12 = arith.constant 0 : index
    %13 = vector.load %arg6[%c0_11, %c0_12] : memref<128x16xf32, #tpu.memory_space<vmem>>, vector<128x16xf32>
    tpu.vector_store %arg6[%c0_11, %c0_12], %12 {strides = array<i32>} : memref<128x16xf32, #tpu.memory_space<vmem>>, vector<128x16xf32>,
    return
  }
  func.func @transform_0(%arg0: i32) -> (i32, i32) {
    %c0_i32 = arith.constant 0 : i32
    %c0_i32_0 = arith.constant 0 : i32
    return %arg0, %c0_i32 : i32, i32
  }
  func.func @transform_1(%arg0: i32) -> (i32, i32) {
    %c0_i32 = arith.constant 0 : i32
    %c0_i32_0 = arith.constant 0 : i32
    %c0_i32_1 = arith.constant 0 : i32
    return %c0_i32, %c0_i32_0 : i32, i32
  }
  func.func @transform_2(%arg0: i32) -> (i32, i32) {
    %c0_i32 = arith.constant 0 : i32
    %c0_i32_0 = arith.constant 0 : i32
    %c0_i32_1 = arith.constant 0 : i32
    return %c0_i32, %c0_i32_0 : i32, i32
  }
  func.func @transform_3(%arg0: i32) -> (i32, i32) {
    %c0_i32 = arith.constant 0 : i32
    %c0_i32_0 = arith.constant 0 : i32
    %c0_i32_1 = arith.constant 0 : i32
    return %c0_i32, %c0_i32_0 : i32, i32
  }
  func.func @transform_4(%arg0: i32) -> (i32, i32) {
    %c0_i32 = arith.constant 0 : i32
    %c0_i32_0 = arith.constant 0 : i32
    %c0_i32_1 = arith.constant 0 : i32
    return %c0_i32, %c0_i32_0 : i32, i32
  }
  func.func @transform_5(%arg0: i32) -> (i32, i32) {
    %c0_i32 = arith.constant 0 : i32
    %c0_i32_0 = arith.constant 0 : i32
    return %arg0, %c0_i32 : i32, i32
  }
}

</mosaic_0001>

<llo_original>
// kernel: branch_forward.1
$region0: #{branch_forward.1}
  #allocation0 [shape = 'u32[]', space=smem, size = 0x4, offset = 0x4, fixed_abs, tag = 'smem constant byte address 0x4 - core index']
  #allocation1 [shape = 'u32[144,128]{1,0:T(1,128)}', space=vmem, size = 0x12000, scoped, tag = 'internal scratch']
  %s0 = inlined_call_operand.vmem [shape: f32[256,32], index: 0, kind: input, shape index: {}]
  %s1 = inlined_call_operand.vmem [shape: f32[32,64], index: 1, kind: input, shape index: {}]
  %s2 = inlined_call_operand.vmem [shape: f32[1,64], index: 2, kind: input, shape index: {}]
  %s3 = inlined_call_operand.vmem [shape: f32[64,16], index: 3, kind: input, shape index: {}]
  %s4 = inlined_call_operand.vmem [shape: f32[1,16], index: 4, kind: input, shape index: {}]
  %s5 = inlined_call_operand.vmem [shape: f32[256,16], index: 5, kind: output, shape index: {}]
  %s6 = sld [smem:[#allocation0]]
  $region53: #{branch_forward.1} parent=0
    _
  %s8 = ssub.s32 1, %s6
  %s9 = scalar_select 0, %s8, %s6
  loop: start=0, step=1, limit=4
  $region2: #{branch_forward.1} parent=0 // loop_pre_header
    _
  $region3: #{branch_forward.1} parent=0 // loop_header
    %s11 = sphi 0, %s15
    %p12 = scmp.ge.s32.totalorder %s11, 4
    %s21 = sphi 0, %s23
    %s24 = sphi 0, %s21
    %s25 = sphi 0, %s24
    %s41 = sphi 0, %s25
    %s45 = sphi 0, %s45
    %s47 = sphi 0, %s45
    %s48 = sphi 0, %s47
    %s62 = sphi 0, %s48
    %s66 = sphi 0, %s66
    %s68 = sphi 0, %s66
    %s69 = sphi 0, %s68
    %s83 = sphi 0, %s69
    %s87 = sphi 0, %s87
    %s89 = sphi 0, %s87
    %s90 = sphi 0, %s89
    %s104 = sphi 0, %s90
    %s108 = sphi 0, %s108
    %s110 = sphi 0, %s108
    %s111 = sphi 0, %s110
    %s125 = sphi 0, %s111
    %s131 = sphi 0, %s133
    %s134 = sphi 0, %s131
    %s135 = sphi 0, %s134
    %s151 = sphi 0, %s135
  $region4: #{branch_forward.1} parent=0 // loop_header_branch
    %14 = sbr.rel (%p12) target = $region8
  $region5: #{branch_forward.1} parent=0 // loop_body
    %s16 = ssub.s32 %s11, 1
    %s17 = ssub.s32 %s11, 2
    %s18 = sadd.s32 %s11, 1
    %s19 = ssub.s32 %s11, %s18
    %p20 = scmp.eq.s32.totalorder %s19, 0
    %s22 = sadd.s32 %s21, 1
    %s23 = scalar_select %p20, %s21, %s22
    %p26 = pneg %p20
    %p27 = scmp.eq.s32.totalorder %s11, 1
    %p28 = por %p26, %p27
    %p29 = scmp.ne.s32.totalorder %s21, %s24
    %p30 = scmp.eq.s32.totalorder %s11, 0
    %p31 = por %p29, %p30
    %p32 = scmp.ne.s32.totalorder %s21, %s24
    %p33 = scmp.eq.s32.totalorder %s16, 1
    %p34 = por %p32, %p33
    %p35 = scmp.ne.s32.totalorder %s24, %s25
    %p36 = scmp.eq.s32.totalorder %s16, 0
    %p37 = por %p35, %p36
    %p38 = scmp.ne.s32.totalorder %s24, %s25
    %p39 = scmp.eq.s32.totalorder %s17, 1
    %p40 = por %p38, %p39
    %p42 = scmp.ne.s32.totalorder %s25, %s41
    %p43 = scmp.eq.s32.totalorder %s17, 0
    %p44 = por %p42, %p43
    %s46 = sadd.s32 %s45, 1
    %p49 = scmp.eq.s32.totalorder %s11, 1
    %p50 = scmp.ne.s32.totalorder %s45, %s47
    %p51 = scmp.eq.s32.totalorder %s11, 0
    %p52 = por %p50, %p51
    %p53 = scmp.ne.s32.totalorder %s45, %s47
    %p54 = scmp.eq.s32.totalorder %s16, 1
    %p55 = por %p53, %p54
    %p56 = scmp.ne.s32.totalorder %s47, %s48
    %p57 = scmp.eq.s32.totalorder %s16, 0
    %p58 = por %p56, %p57
    %p59 = scmp.ne.s32.totalorder %s47, %s48
    %p60 = scmp.eq.s32.totalorder %s17, 1
    %p61 = por %p59, %p60
    %p63 = scmp.ne.s32.totalorder %s48, %s62
    %p64 = scmp.eq.s32.totalorder %s17, 0
    %p65 = por %p63, %p64
    %s67 = sadd.s32 %s66, 1
    %p70 = scmp.eq.s32.totalorder %s11, 1
    %p71 = scmp.ne.s32.totalorder %s66, %s68
    %p72 = scmp.eq.s32.totalorder %s11, 0
    %p73 = por %p71, %p72
    %p74 = scmp.ne.s32.totalorder %s66, %s68
    %p75 = scmp.eq.s32.totalorder %s16, 1
    %p76 = por %p74, %p75
    %p77 = scmp.ne.s32.totalorder %s68, %s69
    %p78 = scmp.eq.s32.totalorder %s16, 0
    %p79 = por %p77, %p78
    %p80 = scmp.ne.s32.totalorder %s68, %s69
    %p81 = scmp.eq.s32.totalorder %s17, 1
    %p82 = por %p80, %p81
    %p84 = scmp.ne.s32.totalorder %s69, %s83
    %p85 = scmp.eq.s32.totalorder %s17, 0
    %p86 = por %p84, %p85
    %s88 = sadd.s32 %s87, 1
    %p91 = scmp.eq.s32.totalorder %s11, 1
    %p92 = scmp.ne.s32.totalorder %s87, %s89
    %p93 = scmp.eq.s32.totalorder %s11, 0
    %p94 = por %p92, %p93
    %p95 = scmp.ne.s32.totalorder %s87, %s89
    %p96 = scmp.eq.s32.totalorder %s16, 1
    %p97 = por %p95, %p96
    %p98 = scmp.ne.s32.totalorder %s89, %s90
    %p99 = scmp.eq.s32.totalorder %s16, 0
    %p100 = por %p98, %p99
    %p101 = scmp.ne.s32.totalorder %s89, %s90
    %p102 = scmp.eq.s32.totalorder %s17, 1
    %p103 = por %p101, %p102
    %p105 = scmp.ne.s32.totalorder %s90, %s104
    %p106 = scmp.eq.s32.totalorder %s17, 0
    %p107 = por %p105, %p106
    %s109 = sadd.s32 %s108, 1
    %p112 = scmp.eq.s32.totalorder %s11, 1
    %p113 = scmp.ne.s32.totalorder %s108, %s110
    %p114 = scmp.eq.s32.totalorder %s11, 0
    %p115 = por %p113, %p114
    %p116 = scmp.ne.s32.totalorder %s108, %s110
    %p117 = scmp.eq.s32.totalorder %s16, 1
    %p118 = por %p116, %p117
    %p119 = scmp.ne.s32.totalorder %s110, %s111
    %p120 = scmp.eq.s32.totalorder %s16, 0
    %p121 = por %p119, %p120
    %p122 = scmp.ne.s32.totalorder %s110, %s111
    %p123 = scmp.eq.s32.totalorder %s17, 1
    %p124 = por %p122, %p123
    %p126 = scmp.ne.s32.totalorder %s111, %s125
    %p127 = scmp.eq.s32.totalorder %s17, 0
    %p128 = por %p126, %p127
    %s129 = ssub.s32 %s11, %s18
    %p130 = scmp.eq.s32.totalorder %s129, 0
    %s132 = sadd.s32 %s131, 1
    %s133 = scalar_select %p130, %s131, %s132
    %p136 = pneg %p130
    %p137 = scmp.eq.s32.totalorder %s11, 1
    %p138 = por %p136, %p137
    %p139 = scmp.ne.s32.totalorder %s131, %s134
    %p140 = scmp.eq.s32.totalorder %s11, 0
    %p141 = por %p139, %p140
    %p142 = scmp.ne.s32.totalorder %s131, %s134
    %p143 = scmp.eq.s32.totalorder %s16, 1
    %p144 = por %p142, %p143
    %p145 = scmp.ne.s32.totalorder %s134, %s135
    %p146 = scmp.eq.s32.totalorder %s16, 0
    %p147 = por %p145, %p146
    %p148 = scmp.ne.s32.totalorder %s134, %s135
    %p149 = scmp.eq.s32.totalorder %s17, 1
    %p150 = por %p148, %p149
    %p152 = scmp.ne.s32.totalorder %s135, %s151
    %p153 = scmp.eq.s32.totalorder %s17, 0
    %p154 = por %p152, %p153
    %p155 = scmp.le.s32.totalorder 1, %s11
    %p156 = scmp.lt.s32.totalorder %s11, 3
    %p157 = pnand %p155, %p156
    %p158 = pneg %p157
    // Predicated region
    $region9: #{branch_forward.1} parent=5 // pred_check
      _
    $region10: #{branch_forward.1} parent=5 // pred_check_branch
      %160 = sbr.rel (%p157) target = $region12
    $region11: #{branch_forward.1} parent=5 // pred_region
      %s161 = ssub.s32 %s11, 1
      // Predicated region
      $region13: #{branch_forward.1} parent=11 // pred_check
        %p162 = pneg %p58
      $region14: #{branch_forward.1} parent=11 // pred_check_branch
        %164 = sbr.rel (%p162) target = $region16
      $region15: #{branch_forward.1} parent=11 // pred_region
        _
      $region16: #{branch_forward.1} parent=11 // pred_fallthru
        _
      // Predicated region
      $region17: #{branch_forward.1} parent=11 // pred_check
        %p165 = pneg %p79
      $region18: #{branch_forward.1} parent=11 // pred_check_branch
        %167 = sbr.rel (%p165) target = $region20
      $region19: #{branch_forward.1} parent=11 // pred_region
        _
      $region20: #{branch_forward.1} parent=11 // pred_fallthru
        _
      // Predicated region
      $region21: #{branch_forward.1} parent=11 // pred_check
        %p168 = pneg %p100
      $region22: #{branch_forward.1} parent=11 // pred_check_branch
        %170 = sbr.rel (%p168) target = $region24
      $region23: #{branch_forward.1} parent=11 // pred_region
        _
      $region24: #{branch_forward.1} parent=11 // pred_fallthru
        _
      // Predicated region
      $region25: #{branch_forward.1} parent=11 // pred_check
        %p171 = pneg %p121
      $region26: #{branch_forward.1} parent=11 // pred_check_branch
        %173 = sbr.rel (%p171) target = $region28
      $region27: #{branch_forward.1} parent=11 // pred_region
        _
      $region28: #{branch_forward.1} parent=11 // pred_fallthru
        _
    $region12: #{branch_forward.1} parent=5 // pred_fallthru
      _
    %p174 = scmp.lt.s32.totalorder %s11, 2
    // Predicated region
    $region29: #{branch_forward.1} parent=5 // pred_check
      %p175 = pneg %p174
    $region30: #{branch_forward.1} parent=5 // pred_check_branch
      %177 = sbr.rel (%p175) target = $region32
    $region31: #{branch_forward.1} parent=5 // pred_region
      // Predicated region
      $region33: #{branch_forward.1} parent=31 // pred_check
        %p178 = pneg %p31
      $region34: #{branch_forward.1} parent=31 // pred_check_branch
        %180 = sbr.rel (%p178) target = $region36
      $region35: #{branch_forward.1} parent=31 // pred_region
        %s181 = smul.u32 16, %s11
        %p182 = scmp.lt.s32.totalorder %s181, 31
        %s183 = scalar_select %p182, %s181, 31
        %s184 = smul.addr %s183, 8
        %s185 = scalar_lea.vmem %s0, %s184
        %s186 = smul.u32 16, %s11
      $region36: #{branch_forward.1} parent=31 // pred_fallthru
        _
    $region32: #{branch_forward.1} parent=5 // pred_fallthru
      _
    %p187 = scmp.le.s32.totalorder 1, %s11
    %p188 = scmp.lt.s32.totalorder %s11, 3
    %p189 = pnand %p187, %p188
    %p190 = pneg %p189
    // Predicated region
    $region37: #{branch_forward.1} parent=5 // pred_check
      _
    $region38: #{branch_forward.1} parent=5 // pred_check_branch
      %192 = sbr.rel (%p189) target = $region40
    $region39: #{branch_forward.1} parent=5 // pred_region
      %s193 = ssub.s32 %s11, 1
      %s194 = smul.u32 16, %s16
      %p195 = scmp.lt.s32.totalorder %s194, 31
      %s196 = scalar_select %p195, %s194, 31
      %s197 = smul.addr %s196, 8
      %s198 = scalar_lea.vmem %s0, %s197
      %p199 = pneg %p37
      %p200 = pneg %p34
      %p201 = pneg %p58
      %p202 = pneg %p55
      %p203 = pneg %p79
      %p204 = pneg %p76
      %p205 = pneg %p100
      %p206 = pneg %p97
      %p207 = pneg %p121
      %p208 = pneg %p118
      %p209 = pneg %p147
      %p210 = pneg %p144
      %s211 = smul.u32 16, %s16
      %p212 = scmp.lt.s32.totalorder %s211, 31
      %s213 = scalar_select %p212, %s211, 31
      %s214 = smul.addr %s213, 8
      %s215 = scalar_lea.vmem %s5, %s214
      %s216 = smul.u32 16, %s16
      %p217 = scmp.lt.s32.totalorder %s216, 31
      %s218 = scalar_select %p217, %s216, 31
      %s219 = smul.addr %s218, 8
      %s220 = scalar_lea.vmem %s0, %s219
      %s221 = smul.u32 16, %s16
      %s222 = smul.u32 16, %s16
      %p223 = scmp.lt.s32.totalorder %s222, 31
      %s224 = scalar_select %p223, %s222, 31
      %s225 = smul.addr %s224, 8
      %s226 = scalar_lea.vmem %s5, %s225
      %s227 = smul.u32 16, %s16
      %v228 = vld [vmem:[%s220] sm:$0xff]
      %v229 = vld [vmem:[%s220 + $0x8] sm:$0xff]
      %v230 = vld [vmem:[%s220 + $0x10] sm:$0xff]
      %v231 = vld [vmem:[%s220 + $0x18] sm:$0xff]
      %v232 = vld [vmem:[%s220 + $0x20] sm:$0xff]
      %v233 = vld [vmem:[%s220 + $0x28] sm:$0xff]
      %v234 = vld [vmem:[%s220 + $0x30] sm:$0xff]
      %v235 = vld [vmem:[%s220 + $0x38] sm:$0xff]
      %v236 = vld [vmem:[%s220 + $0x40] sm:$0xff]
      %v237 = vld [vmem:[%s220 + $0x48] sm:$0xff]
      %v238 = vld [vmem:[%s220 + $0x50] sm:$0xff]
      %v239 = vld [vmem:[%s220 + $0x58] sm:$0xff]
      %v240 = vld [vmem:[%s220 + $0x60] sm:$0xff]
      %v241 = vld [vmem:[%s220 + $0x68] sm:$0xff]
      %v242 = vld [vmem:[%s220 + $0x70] sm:$0xff]
      %v243 = vld [vmem:[%s220 + $0x78] sm:$0xff]
      %v244 = vld [vmem:[%s1] sm:$0xff]
      %v245 = vld [vmem:[%s1 + $0x8] sm:$0xff]
      %v246 = vld [vmem:[%s1 + $0x10] sm:$0xff]
      %v247 = vld [vmem:[%s1 + $0x18] sm:$0xff]
      %v248 = vld [vmem:[%s2] sm:$0x1]
      %v250 = vlaneseq
      %v251 = vshrl.u32 %v250, 7
      %v252 = vsub.s32 0, %v251
      %v253 = vrot.slane %v248, %v252
      %vm255 = vcmask 261120
      %v257 = vsel %vm255, %v228, 0
      %v260 = vsel %vm255, %v229, 0
      %v263 = vsel %vm255, %v230, 0
      %v266 = vsel %vm255, %v231, 0
      %v269 = vsel %vm255, %v232, 0
      %v272 = vsel %vm255, %v233, 0
      %v275 = vsel %vm255, %v234, 0
      %v278 = vsel %vm255, %v235, 0
      %v281 = vsel %vm255, %v236, 0
      %v284 = vsel %vm255, %v237, 0
      %v287 = vsel %vm255, %v238, 0
      %v290 = vsel %vm255, %v239, 0
      %v293 = vsel %vm255, %v240, 0
      %v296 = vsel %vm255, %v241, 0
      %v299 = vsel %vm255, %v242, 0
      %v302 = vsel %vm255, %v243, 0
      %304 = vmatprep.subr.mxu0 0.0
      %305 = vmatpush1.msra.mxu0 %v244
      %306 = vmatprep.subr.mxu0 0.0
      %307 = vmatpush1.msra.mxu0 %v245
      %308 = vmatprep.subr.mxu0 0.0
      %309 = vmatpush1.msra.mxu0 %v246
      %310 = vmatprep.subr.mxu0 0.0
      %311 = vmatpush1.msra.mxu0 %v247
      %312 = vmatprep.subr.mxu0 0.0
      %313 = vmatpush1.msra.mxu0 0.0
      %314 = vmatprep.subr.mxu0 0.0
      %315 = vmatpush1.msra.mxu0 0.0
      %316 = vmatprep.subr.mxu0 0.0
      %317 = vmatpush1.msra.mxu0 0.0
      %318 = vmatprep.subr.mxu0 0.0
      %319 = vmatpush1.msra.mxu0 0.0
      %320 = vmatprep.subr.mxu0 0.0
      %321 = vmatpush1.msra.mxu0 0.0
      %322 = vmatprep.subr.mxu0 0.0
      %323 = vmatpush1.msra.mxu0 0.0
      %324 = vmatprep.subr.mxu0 0.0
      %325 = vmatpush1.msra.mxu0 0.0
      %326 = vmatprep.subr.mxu0 0.0
      %327 = vmatpush1.msra.mxu0 0.0
      %328 = vmatprep.subr.mxu0 0.0
      %329 = vmatpush1.msra.mxu0 0.0
      %330 = vmatprep.subr.mxu0 0.0
      %331 = vmatpush1.msra.mxu0 0.0
      %332 = vmatprep.subr.mxu0 0.0
      %333 = vmatpush1.msra.mxu0 0.0
      %334 = vmatprep.subr.mxu0 0.0
      %335 = vmatpush1.msra.mxu0 0.0
      %336 = vmatprep.subr.mxu0 0.0
      %337 = vmatpush1.msra.mxu0 0.0
      %338 = vmatprep.subr.mxu0 0.0
      %339 = vmatpush1.msra.mxu0 0.0
      %340 = vmatprep.subr.mxu0 0.0
      %341 = vmatpush1.msra.mxu0 0.0
      %342 = vmatprep.subr.mxu0 0.0
      %343 = vmatpush1.msra.mxu0 0.0
      %344 = vmatprep.subr.mxu0 0.0
      %345 = vmatpush1.msra.mxu0 0.0
      %346 = vmatprep.subr.mxu0 0.0
      %347 = vmatpush1.msra.mxu0 0.0
      %348 = vmatprep.subr.mxu0 0.0
      %349 = vmatpush1.msra.mxu0 0.0
      %350 = vmatprep.subr.mxu0 0.0
      %351 = vmatpush1.msra.mxu0 0.0
      %352 = vmatprep.subr.mxu0 0.0
      %353 = vmatpush1.msra.mxu0 0.0
      %354 = vmatprep.subr.mxu0 0.0
      %355 = vmatpush1.msra.mxu0 0.0
      %356 = vmatprep.subr.mxu0 0.0
      %357 = vmatpush1.msra.mxu0 0.0
      %358 = vmatprep.subr.mxu0 0.0
      %359 = vmatpush1.msra.mxu0 0.0
      %360 = vmatprep.subr.mxu0 0.0
      %361 = vmatpush1.msra.mxu0 0.0
      %362 = vmatprep.subr.mxu0 0.0
      %363 = vmatpush1.msra.mxu0 0.0
      %364 = vmatprep.subr.mxu0 0.0
      %365 = vmatpush1.msra.mxu0 0.0
      %366 = vmatprep.subr.mxu0 0.0
      %367 = vmatpush1.msra.mxu0 0.0
      %368 = vmatprep.mubr.f32.mxu0 0.0
      %369 = vmatmul.mubr.f32.gmra.mrb[0].mxu0 %v257
      %v370 = vpop.f32.mrb[0].mxu0
      %v371 = vadd.f32 %v253, %v370
      %v372 = vpop.f32.mrb[0].mxu0
      %373 = vmatprep.mubr.f32.mxu0 0.0
      %374 = vmatmul.mubr.f32.gmra.mrb[0].mxu0 %v260
      %v375 = vpop.f32.mrb[0].mxu0
      %v376 = vadd.f32 %v253, %v375
      %v377 = vpop.f32.mrb[0].mxu0
      %378 = vmatprep.mubr.f32.mxu0 0.0
      %379 = vmatmul.mubr.f32.gmra.mrb[0].mxu0 %v263
      %v380 = vpop.f32.mrb[0].mxu0
      %v381 = vadd.f32 %v253, %v380
      %v382 = vpop.f32.mrb[0].mxu0
      %383 = vmatprep.mubr.f32.mxu0 0.0
      %384 = vmatmul.mubr.f32.gmra.mrb[0].mxu0 %v266
      %v385 = vpop.f32.mrb[0].mxu0
      %v386 = vadd.f32 %v253, %v385
      %v387 = vpop.f32.mrb[0].mxu0
      %388 = vmatprep.mubr.f32.mxu0 0.0
      %389 = vmatmul.mubr.f32.gmra.mrb[0].mxu0 %v269
      %v390 = vpop.f32.mrb[0].mxu0
      %v391 = vadd.f32 %v253, %v390
      %v392 = vpop.f32.mrb[0].mxu0
      %393 = vmatprep.mubr.f32.mxu0 0.0
      %394 = vmatmul.mubr.f32.gmra.mrb[0].mxu0 %v272
      %v395 = vpop.f32.mrb[0].mxu0
      %v396 = vadd.f32 %v253, %v395
      %v397 = vpop.f32.mrb[0].mxu0
      %398 = vmatprep.mubr.f32.mxu0 0.0
      %399 = vmatmul.mubr.f32.gmra.mrb[0].mxu0 %v275
      %v400 = vpop.f32.mrb[0].mxu0
      %v401 = vadd.f32 %v253, %v400
      %v402 = vpop.f32.mrb[0].mxu0
      %403 = vmatprep.mubr.f32.mxu0 0.0
      %404 = vmatmul.mubr.f32.gmra.mrb[0].mxu0 %v278
      %v405 = vpop.f32.mrb[0].mxu0
      %v406 = vadd.f32 %v253, %v405
      %v407 = vpop.f32.mrb[0].mxu0
      %408 = vmatprep.mubr.f32.mxu0 0.0
      %409 = vmatmul.mubr.f32.gmra.mrb[0].mxu0 %v281
      %v410 = vpop.f32.mrb[0].mxu0
      %v411 = vadd.f32 %v253, %v410
      %v412 = vpop.f32.mrb[0].mxu0
      %413 = vmatprep.mubr.f32.mxu0 0.0
      %414 = vmatmul.mubr.f32.gmra.mrb[0].mxu0 %v284
      %v415 = vpop.f32.mrb[0].mxu0
      %v416 = vadd.f32 %v253, %v415
      %v417 = vpop.f32.mrb[0].mxu0
      %418 = vmatprep.mubr.f32.mxu0 0.0
      %419 = vmatmul.mubr.f32.gmra.mrb[0].mxu0 %v287
      %v420 = vpop.f32.mrb[0].mxu0
      %v421 = vadd.f32 %v253, %v420
      %v422 = vpop.f32.mrb[0].mxu0
      %423 = vmatprep.mubr.f32.mxu0 0.0
      %424 = vmatmul.mubr.f32.gmra.mrb[0].mxu0 %v290
      %v425 = vpop.f32.mrb[0].mxu0
      %v426 = vadd.f32 %v253, %v425
      %v427 = vpop.f32.mrb[0].mxu0
      %428 = vmatprep.mubr.f32.mxu0 0.0
      %429 = vmatmul.mubr.f32.gmra.mrb[0].mxu0 %v293
      %v430 = vpop.f32.mrb[0].mxu0
      %v431 = vadd.f32 %v253, %v430
      %v432 = vpop.f32.mrb[0].mxu0
      %433 = vmatprep.mubr.f32.mxu0 0.0
      %434 = vmatmul.mubr.f32.gmra.mrb[0].mxu0 %v296
      %v435 = vpop.f32.mrb[0].mxu0
      %v436 = vadd.f32 %v253, %v435
      %v437 = vpop.f32.mrb[0].mxu0
      %438 = vmatprep.mubr.f32.mxu0 0.0
      %439 = vmatmul.mubr.f32.gmra.mrb[0].mxu0 %v299
      %v440 = vpop.f32.mrb[0].mxu0
      %v441 = vadd.f32 %v253, %v440
      %v442 = vpop.f32.mrb[0].mxu0
      %443 = vmatprep.mubr.f32.mxu0 0.0
      %444 = vmatmul.mubr.f32.gmra.mrb[0].mxu0 %v302
      %v445 = vpop.f32.mrb[0].mxu0
      %v446 = vadd.f32 %v253, %v445
      %v447 = vpop.f32.mrb[0].mxu0
      %448 = vdwg.mxu0
      %v449 = vmax.f32 %v371, 0.0
      %v450 = vmax.f32 %v376, 0.0
      %v451 = vmax.f32 %v381, 0.0
      %v452 = vmax.f32 %v386, 0.0
      %v453 = vmax.f32 %v391, 0.0
      %v454 = vmax.f32 %v396, 0.0
      %v455 = vmax.f32 %v401, 0.0
      %v456 = vmax.f32 %v406, 0.0
      %v457 = vmax.f32 %v411, 0.0
      %v458 = vmax.f32 %v416, 0.0
      %v459 = vmax.f32 %v421, 0.0
      %v460 = vmax.f32 %v426, 0.0
      %v461 = vmax.f32 %v431, 0.0
      %v462 = vmax.f32 %v436, 0.0
      %v463 = vmax.f32 %v441, 0.0
      %v464 = vmax.f32 %v446, 0.0
      %v465 = vld [vmem:[%s3] sm:$0xff]
      %v466 = vld [vmem:[%s3 + $0x8] sm:$0xff]
      %v467 = vld [vmem:[%s3 + $0x10] sm:$0xff]
      %v468 = vld [vmem:[%s3 + $0x18] sm:$0xff]
      %v469 = vld [vmem:[%s3 + $0x20] sm:$0xff]
      %v470 = vld [vmem:[%s3 + $0x28] sm:$0xff]
      %v471 = vld [vmem:[%s3 + $0x30] sm:$0xff]
      %v472 = vld [vmem:[%s3 + $0x38] sm:$0xff]
      %v473 = vld [vmem:[%s4] sm:$0x1]
      %v475 = vlaneseq
      %v476 = vshrl.u32 %v475, 7
      %v477 = vsub.s32 0, %v476
      %v478 = vrot.slane %v473, %v477
      %vm480 = vcmask 523264
      %v482 = vsel %vm480, %v449, 0
      %v485 = vsel %vm480, %v450, 0
      %v488 = vsel %vm480, %v451, 0
      %v491 = vsel %vm480, %v452, 0
      %v494 = vsel %vm480, %v453, 0
      %v497 = vsel %vm480, %v454, 0
      %v500 = vsel %vm480, %v455, 0
      %v503 = vsel %vm480, %v456, 0
      %v506 = vsel %vm480, %v457, 0
      %v509 = vsel %vm480, %v458, 0
      %v512 = vsel %vm480, %v459, 0
      %v515 = vsel %vm480, %v460, 0
      %v518 = vsel %vm480, %v461, 0
      %v521 = vsel %vm480, %v462, 0
      %v524 = vsel %vm480, %v463, 0
      %v527 = vsel %vm480, %v464, 0
      %529 = vmatprep.subr.mxu0 0.0
      %530 = vmatpush1.msra.mxu0 %v465
      %531 = vmatprep.subr.mxu0 0.0
      %532 = vmatpush1.msra.mxu0 %v466
      %533 = vmatprep.subr.mxu0 0.0
      %534 = vmatpush1.msra.mxu0 %v467
      %535 = vmatprep.subr.mxu0 0.0
      %536 = vmatpush1.msra.mxu0 %v468
      %537 = vmatprep.subr.mxu0 0.0
      %538 = vmatpush1.msra.mxu0 %v469
      %539 = vmatprep.subr.mxu0 0.0
      %540 = vmatpush1.msra.mxu0 %v470
      %541 = vmatprep.subr.mxu0 0.0
      %542 = vmatpush1.msra.mxu0 %v471
      %543 = vmatprep.subr.mxu0 0.0
      %544 = vmatpush1.msra.mxu0 %v472
      %545 = vmatprep.subr.mxu0 0.0
      %546 = vmatpush1.msra.mxu0 0.0
      %547 = vmatprep.subr.mxu0 0.0
      %548 = vmatpush1.msra.mxu0 0.0
      %549 = vmatprep.subr.mxu0 0.0
      %550 = vmatpush1.msra.mxu0 0.0
      %551 = vmatprep.subr.mxu0 0.0
      %552 = vmatpush1.msra.mxu0 0.0
      %553 = vmatprep.subr.mxu0 0.0
      %554 = vmatpush1.msra.mxu0 0.0
      %555 = vmatprep.subr.mxu0 0.0
      %556 = vmatpush1.msra.mxu0 0.0
      %557 = vmatprep.subr.mxu0 0.0
      %558 = vmatpush1.msra.mxu0 0.0
      %559 = vmatprep.subr.mxu0 0.0
      %560 = vmatpush1.msra.mxu0 0.0
      %561 = vmatprep.subr.mxu0 0.0
      %562 = vmatpush1.msra.mxu0 0.0
      %563 = vmatprep.subr.mxu0 0.0
      %564 = vmatpush1.msra.mxu0 0.0
      %565 = vmatprep.subr.mxu0 0.0
      %566 = vmatpush1.msra.mxu0 0.0
      %567 = vmatprep.subr.mxu0 0.0
      %568 = vmatpush1.msra.mxu0 0.0
      %569 = vmatprep.subr.mxu0 0.0
      %570 = vmatpush1.msra.mxu0 0.0
      %571 = vmatprep.subr.mxu0 0.0
      %572 = vmatpush1.msra.mxu0 0.0
      %573 = vmatprep.subr.mxu0 0.0
      %574 = vmatpush1.msra.mxu0 0.0
      %575 = vmatprep.subr.mxu0 0.0
      %576 = vmatpush1.msra.mxu0 0.0
      %577 = vmatprep.subr.mxu0 0.0
      %578 = vmatpush1.msra.mxu0 0.0
      %579 = vmatprep.subr.mxu0 0.0
      %580 = vmatpush1.msra.mxu0 0.0
      %581 = vmatprep.subr.mxu0 0.0
      %582 = vmatpush1.msra.mxu0 0.0
      %583 = vmatprep.subr.mxu0 0.0
      %584 = vmatpush1.msra.mxu0 0.0
      %585 = vmatprep.subr.mxu0 0.0
      %586 = vmatpush1.msra.mxu0 0.0
      %587 = vmatprep.subr.mxu0 0.0
      %588 = vmatpush1.msra.mxu0 0.0
      %589 = vmatprep.subr.mxu0 0.0
      %590 = vmatpush1.msra.mxu0 0.0
      %591 = vmatprep.subr.mxu0 0.0
      %592 = vmatpush1.msra.mxu0 0.0
      %593 = vmatprep.mubr.f32.mxu0 0.0
      %594 = vmatmul.mubr.f32.gmra.mrb[0].mxu0 %v482
      %v595 = vpop.f32.mrb[0].mxu0
      %v596 = vadd.f32 %v478, %v595
      %v597 = vpop.f32.mrb[0].mxu0
      %598 = vmatprep.mubr.f32.mxu0 0.0
      %599 = vmatmul.mubr.f32.gmra.mrb[0].mxu0 %v485
      %v600 = vpop.f32.mrb[0].mxu0
      %v601 = vadd.f32 %v478, %v600
      %v602 = vpop.f32.mrb[0].mxu0
      %603 = vmatprep.mubr.f32.mxu0 0.0
      %604 = vmatmul.mubr.f32.gmra.mrb[0].mxu0 %v488
      %v605 = vpop.f32.mrb[0].mxu0
      %v606 = vadd.f32 %v478, %v605
      %v607 = vpop.f32.mrb[0].mxu0
      %608 = vmatprep.mubr.f32.mxu0 0.0
      %609 = vmatmul.mubr.f32.gmra.mrb[0].mxu0 %v491
      %v610 = vpop.f32.mrb[0].mxu0
      %v611 = vadd.f32 %v478, %v610
      %v612 = vpop.f32.mrb[0].mxu0
      %613 = vmatprep.mubr.f32.mxu0 0.0
      %614 = vmatmul.mubr.f32.gmra.mrb[0].mxu0 %v494
      %v615 = vpop.f32.mrb[0].mxu0
      %v616 = vadd.f32 %v478, %v615
      %v617 = vpop.f32.mrb[0].mxu0
      %618 = vmatprep.mubr.f32.mxu0 0.0
      %619 = vmatmul.mubr.f32.gmra.mrb[0].mxu0 %v497
      %v620 = vpop.f32.mrb[0].mxu0
      %v621 = vadd.f32 %v478, %v620
      %v622 = vpop.f32.mrb[0].mxu0
      %623 = vmatprep.mubr.f32.mxu0 0.0
      %624 = vmatmul.mubr.f32.gmra.mrb[0].mxu0 %v500
      %v625 = vpop.f32.mrb[0].mxu0
      %v626 = vadd.f32 %v478, %v625
      %v627 = vpop.f32.mrb[0].mxu0
      %628 = vmatprep.mubr.f32.mxu0 0.0
      %629 = vmatmul.mubr.f32.gmra.mrb[0].mxu0 %v503
      %v630 = vpop.f32.mrb[0].mxu0
      %v631 = vadd.f32 %v478, %v630
      %v632 = vpop.f32.mrb[0].mxu0
      %633 = vmatprep.mubr.f32.mxu0 0.0
      %634 = vmatmul.mubr.f32.gmra.mrb[0].mxu0 %v506
      %v635 = vpop.f32.mrb[0].mxu0
      %v636 = vadd.f32 %v478, %v635
      %v637 = vpop.f32.mrb[0].mxu0
      %638 = vmatprep.mubr.f32.mxu0 0.0
      %639 = vmatmul.mubr.f32.gmra.mrb[0].mxu0 %v509
      %v640 = vpop.f32.mrb[0].mxu0
      %v641 = vadd.f32 %v478, %v640
      %v642 = vpop.f32.mrb[0].mxu0
      %643 = vmatprep.mubr.f32.mxu0 0.0
      %644 = vmatmul.mubr.f32.gmra.mrb[0].mxu0 %v512
      %v645 = vpop.f32.mrb[0].mxu0
      %v646 = vadd.f32 %v478, %v645
      %v647 = vpop.f32.mrb[0].mxu0
      %648 = vmatprep.mubr.f32.mxu0 0.0
      %649 = vmatmul.mubr.f32.gmra.mrb[0].mxu0 %v515
      %v650 = vpop.f32.mrb[0].mxu0
      %v651 = vadd.f32 %v478, %v650
      %v652 = vpop.f32.mrb[0].mxu0
      %653 = vmatprep.mubr.f32.mxu0 0.0
      %654 = vmatmul.mubr.f32.gmra.mrb[0].mxu0 %v518
      %v655 = vpop.f32.mrb[0].mxu0
      %v656 = vadd.f32 %v478, %v655
      %v657 = vpop.f32.mrb[0].mxu0
      %658 = vmatprep.mubr.f32.mxu0 0.0
      %659 = vmatmul.mubr.f32.gmra.mrb[0].mxu0 %v521
      %v660 = vpop.f32.mrb[0].mxu0
      %v661 = vadd.f32 %v478, %v660
      %v662 = vpop.f32.mrb[0].mxu0
      %663 = vmatprep.mubr.f32.mxu0 0.0
      %664 = vmatmul.mubr.f32.gmra.mrb[0].mxu0 %v524
      %v665 = vpop.f32.mrb[0].mxu0
      %v666 = vadd.f32 %v478, %v665
      %v667 = vpop.f32.mrb[0].mxu0
      %668 = vmatprep.mubr.f32.mxu0 0.0
      %669 = vmatmul.mubr.f32.gmra.mrb[0].mxu0 %v527
      %v670 = vpop.f32.mrb[0].mxu0
      %v671 = vadd.f32 %v478, %v670
      %v672 = vpop.f32.mrb[0].mxu0
      %673 = vdwg.mxu0
      %vm674 = vcmask 130048
      %675 = vst.msk [vmem:[%s226] sm:$0xff] %vm674, %v596
      %676 = vst.msk [vmem:[%s226 + $0x8] sm:$0xff] %vm674, %v601
      %677 = vst.msk [vmem:[%s226 + $0x10] sm:$0xff] %vm674, %v606
      %678 = vst.msk [vmem:[%s226 + $0x18] sm:$0xff] %vm674, %v611
      %679 = vst.msk [vmem:[%s226 + $0x20] sm:$0xff] %vm674, %v616
      %680 = vst.msk [vmem:[%s226 + $0x28] sm:$0xff] %vm674, %v621
      %681 = vst.msk [vmem:[%s226 + $0x30] sm:$0xff] %vm674, %v626
      %682 = vst.msk [vmem:[%s226 + $0x38] sm:$0xff] %vm674, %v631
      %683 = vst.msk [vmem:[%s226 + $0x40] sm:$0xff] %vm674, %v636
      %684 = vst.msk [vmem:[%s226 + $0x48] sm:$0xff] %vm674, %v641
      %685 = vst.msk [vmem:[%s226 + $0x50] sm:$0xff] %vm674, %v646
      %686 = vst.msk [vmem:[%s226 + $0x58] sm:$0xff] %vm674, %v651
      %687 = vst.msk [vmem:[%s226 + $0x60] sm:$0xff] %vm674, %v656
      %688 = vst.msk [vmem:[%s226 + $0x68] sm:$0xff] %vm674, %v661
      %689 = vst.msk [vmem:[%s226 + $0x70] sm:$0xff] %vm674, %v666
      %690 = vst.msk [vmem:[%s226 + $0x78] sm:$0xff] %vm674, %v671
      %s691 = smul.u32 16, %s16
      %p692 = scmp.lt.s32.totalorder %s691, 31
      %s693 = scalar_select %p692, %s691, 31
      %s694 = smul.addr %s693, 8
      %s695 = scalar_lea.vmem %s5, %s694
      // Predicated region
      $region41: #{branch_forward.1} parent=39 // pred_check
        %p696 = pneg %p144
      $region42: #{branch_forward.1} parent=39 // pred_check_branch
        %698 = sbr.rel (%p696) target = $region44
      $region43: #{branch_forward.1} parent=39 // pred_region
        %s699 = smul.u32 16, %s16
      $region44: #{branch_forward.1} parent=39 // pred_fallthru
        _
    $region40: #{branch_forward.1} parent=5 // pred_fallthru
      _
    %p700 = scmp.le.s32.totalorder 2, %s11
    // Predicated region
    $region45: #{branch_forward.1} parent=5 // pred_check
      %p701 = pneg %p700
    $region46: #{branch_forward.1} parent=5 // pred_check_branch
      %703 = sbr.rel (%p701) target = $region48
    $region47: #{branch_forward.1} parent=5 // pred_region
      %s704 = ssub.s32 %s11, 2
      // Predicated region
      $region49: #{branch_forward.1} parent=47 // pred_check
        %p705 = pneg %p150
      $region50: #{branch_forward.1} parent=47 // pred_check_branch
        %707 = sbr.rel (%p705) target = $region52
      $region51: #{branch_forward.1} parent=47 // pred_region
        %s708 = smul.u32 16, %s17
        %p709 = scmp.lt.s32.totalorder %s708, 31
        %s710 = scalar_select %p709, %s708, 31
        %s711 = smul.addr %s710, 8
        %s712 = scalar_lea.vmem %s5, %s711
      $region52: #{branch_forward.1} parent=47 // pred_fallthru
        _
    $region48: #{branch_forward.1} parent=5 // pred_fallthru
      _
  $region6: #{branch_forward.1} parent=0 // loop_footer
    %s15 = sadd.s32 1, %s11
  $region7: #{branch_forward.1} parent=0 // loop_footer_branch
    %10 = sbr.rel target = $region3
  $region8: #{branch_forward.1} parent=0 // loop_exit
    _

</llo_original>
